<compile_context>
chip_gen: v7x
topology: tpu7x:2x2x1
jax: 0.10.0
libtpu: 0.0.40
codegen_flags: <defaults>
</compile_context>

<pallas_src>
import functools

import jax
import jax.numpy as jnp
from jax.experimental import pallas as pl
from jax.experimental.pallas import tpu as pltpu

LANE = 128
SUBLANE = 8


def _round_up(x, m):
    return ((x + m - 1) // m) * m


def _decoder_mlp_kernel(z_ref, w1_ref, b1_ref, w2_ref, b2_ref, w3_ref, b3_ref,
                        o_ref, *, mxu_dtype):
    z = z_ref[...]
    if z.dtype != jnp.float32:
        z = z.astype(jnp.float32)

    in_features = z_ref.shape[1]

    # Layer 1: contraction dim is tiny (input_size=2) -> VPU broadcast-FMAs instead of an
    # MXU matmul that would pad K to 128 and pay full push/pop latency.
    if in_features <= 8:
        h = z[:, 0:1] * w1_ref[0:1, :]
        for k in range(1, in_features):
            h = h + z[:, k:k + 1] * w1_ref[k:k + 1, :]
        h = h + b1_ref[...]
    else:
        h = jnp.dot(z, w1_ref[...], preferred_element_type=jnp.float32) + b1_ref[...]
    h = jnp.maximum(h, 0.0)

    # Layer 2: lane-dense (128-wide) MXU matmul, bf16 inputs by default, f32 accumulation.
    a = h if mxu_dtype == jnp.float32 else h.astype(mxu_dtype)
    h = jnp.dot(a, w2_ref[...], preferred_element_type=jnp.float32) + b2_ref[...]
    h = jnp.maximum(h, 0.0)

    # Layer 3: MXU matmul against the lane-padded w3; keep the 128-wide tile in VMEM but
    # write back only the real `ncat` columns (narrow output block -> tiny HBM writeback).
    a = h if mxu_dtype == jnp.float32 else h.astype(mxu_dtype)
    out = jnp.dot(a, w3_ref[...], preferred_element_type=jnp.float32) + b3_ref[...]
    ncat = o_ref.shape[1]
    o_ref[...] = out[:, :ncat].astype(o_ref.dtype)


def prepare_params(params, *, mxu_dtype=jnp.bfloat16):
    """Pad / cast the weights ONCE (hoisted out of the per-call wrapper).

    Hidden widths and the output width are zero-padded to 128 lanes so the in-kernel
    matmuls are lane-dense; zero-padded columns are exact no-ops through Linear(+ReLU).
    w2/w3 are stored in `mxu_dtype` (bf16 by default -> v6e/v7x MXU-native inputs,
    accumulation stays f32 in-kernel).  w1 and all biases stay f32 (layer 1 runs on the VPU).
    """
    w1 = jnp.asarray(params["w1"], jnp.float32)
    w2 = jnp.asarray(params["w2"], jnp.float32)
    w3 = jnp.asarray(params["w3"], jnp.float32)
    b1 = jnp.asarray(params["b1"], jnp.float32).reshape(1, -1)
    b2 = jnp.asarray(params["b2"], jnp.float32).reshape(1, -1)
    b3 = jnp.asarray(params["b3"], jnp.float32).reshape(1, -1)

    in_f, h1 = w1.shape
    h2 = w2.shape[1]
    ncat = w3.shape[1]
    h1p, h2p, ncp = (_round_up(d, LANE) for d in (h1, h2, ncat))

    prepared = {
        "w1": jnp.pad(w1, ((0, 0), (0, h1p - h1))),
        "b1": jnp.pad(b1, ((0, 0), (0, h1p - h1))),
        "w2": jnp.pad(w2, ((0, h1p - h1), (0, h2p - h2))).astype(mxu_dtype),
        "b2": jnp.pad(b2, ((0, 0), (0, h2p - h2))),
        "w3": jnp.pad(w3, ((0, h2p - h2), (0, ncp - ncat))).astype(mxu_dtype),
        "b3": jnp.pad(b3, ((0, 0), (0, ncp - ncat))),
    }
    meta = dict(in_features=in_f, ncat=ncat, h1p=h1p, h2p=h2p, ncp=ncp,
                mxu_dtype=mxu_dtype)
    return prepared, meta


def _choose_batch_tile(B, block_b, row_align, min_grid_steps):
    block_b = max(_round_up(block_b, row_align), row_align)
    bp0 = _round_up(B, row_align)
    tb = min(bp0, block_b)
    # Guarantee >=2 grid steps when the batch allows it (v7x dual-TC sharding).
    if pl.cdiv(bp0, tb) < min_grid_steps and bp0 >= min_grid_steps * row_align:
        tb = _round_up(pl.cdiv(bp0, min_grid_steps), row_align)
    bp = _round_up(bp0, tb)
    return tb, bp


def decoder_nn_forward(z, prepared, meta, *, block_b=4096, out_dtype=jnp.float32,
                       min_grid_steps=2):
    """Fused Linear->ReLU->Linear->ReLU->Linear forward (DecoderNN.forward).

    block_b:        rows of z per grid step (large to amortize ~0.35us/step overhead).
    out_dtype:      set jnp.bfloat16 to halve the remaining output writeback if tolerated.
    min_grid_steps: keep >=2 so dimension_semantics=("parallel",) shards over v7x's 2 TCs.
    """
    B, in_f = z.shape
    assert in_f == meta["in_features"]
    mxu_dtype = meta["mxu_dtype"]
    ncat, h1p, h2p, ncp = meta["ncat"], meta["h1p"], meta["h2p"], meta["ncp"]

    row_align = 16 if jnp.dtype(mxu_dtype).itemsize == 2 else SUBLANE
    tb, bp = _choose_batch_tile(B, block_b, row_align, min_grid_steps)
    grid = (bp // tb,)

    zp = z if z.dtype == jnp.float32 else z.astype(jnp.float32)
    if bp != B:
        zp = jnp.pad(zp, ((0, bp - B), (0, 0)))

    const_map = lambda i: (0, 0)
    in_specs = [
        pl.BlockSpec((tb, in_f), lambda i: (i, 0)),   # activations: pipelined over batch
        pl.BlockSpec((in_f, h1p), const_map),         # weights / biases: VMEM-resident
        pl.BlockSpec((1, h1p), const_map),
        pl.BlockSpec((h1p, h2p), const_map),
        pl.BlockSpec((1, h2p), const_map),
        pl.BlockSpec((h2p, ncp), const_map),
        pl.BlockSpec((1, ncp), const_map),
    ]
    # Narrow output: only the real `ncat` columns ever reach HBM (16 B/row in f32 instead of
    # 512 B/row for a 128-lane-padded f32 tile).  Last dim == full array dim, so it is legal.
    out_spec = pl.BlockSpec((tb, ncat), lambda i: (i, 0))

    w_isize = jnp.dtype(mxu_dtype).itemsize
    o_isize = jnp.dtype(out_dtype).itemsize
    weight_bytes = (4 * (in_f * h1p + h1p + h2p + ncp)
                    + w_isize * (h1p * h2p + h2p * ncp))
    flops = 2 * bp * (in_f * h1p + h1p * h2p + h2p * ncp)
    bytes_accessed = 4 * bp * in_f + o_isize * bp * ncat + weight_bytes

    # VMEM: double-buffered in/out tiles + resident params + live intermediates, with 2x
    # headroom; clamp to [8 MiB, 48 MiB] so it is safe on v7x (64 MiB physical VMEM).
    inter_bytes = tb * (h1p + h2p + ncp) * 4 + tb * (h1p + h2p) * w_isize
    per_step = 2 * (4 * tb * in_f + o_isize * tb * ncat) + weight_bytes + inter_bytes
    vmem_limit = int(min(max(2 * per_step, 8 << 20), 48 << 20))

    out = pl.pallas_call(
        functools.partial(_decoder_mlp_kernel, mxu_dtype=mxu_dtype),
        out_shape=jax.ShapeDtypeStruct((bp, ncat), out_dtype),
        grid=grid,
        in_specs=in_specs,
        out_specs=out_spec,
        compiler_params=pltpu.CompilerParams(
            dimension_semantics=("parallel",),
            vmem_limit_bytes=vmem_limit,
        ),
        cost_estimate=pl.CostEstimate(
            flops=flops, transcendentals=0, bytes_accessed=bytes_accessed),
    )(zp, prepared["w1"], prepared["b1"], prepared["w2"], prepared["b2"],
      prepared["w3"], prepared["b3"])

    return out[:B] if bp != B else out


def init_params(key, input_size=2, ncat=4, h_dim=(32, 32)):
    """Deterministic synthetic init mimicking nn.Linear shapes.

    PyTorch Linear(h0, h1) has weight [h1, h0]; we generate in that convention
    and transpose to [h0, h1] for the kernel's x @ W layout.
    """
    hs = [input_size] + list(h_dim) + [ncat]
    params = {}
    for li, (h0, h1) in enumerate(zip(hs, hs[1:]), start=1):
        key, kw, kb = jax.random.split(key, 3)
        bound = 1.0 / (h0 ** 0.5)  # same range as PyTorch's default uniform init
        w_torch = jax.random.uniform(kw, (h1, h0), jnp.float32, -bound, bound)
        b = jax.random.uniform(kb, (h1,), jnp.float32, -bound, bound)
        params[f"w{li}"] = w_torch.T          # [in, out]
        params[f"b{li}"] = b.reshape(1, h1)   # [1, out]
    return params


def reference_forward(z, params, *, mxu_dtype=jnp.float32):
    """Pure-JAX reference; with mxu_dtype=bf16 it mirrors the kernel's cast points."""
    hi = jax.lax.Precision.HIGHEST
    h = jnp.maximum(jnp.dot(z, params["w1"], precision=hi) + params["b1"], 0.0)
    if mxu_dtype == jnp.float32:
        h = jnp.maximum(jnp.dot(h, params["w2"], precision=hi) + params["b2"], 0.0)
        return jnp.dot(h, params["w3"], precision=hi) + params["b3"]
    w2 = params["w2"].astype(mxu_dtype)
    w3 = params["w3"].astype(mxu_dtype)
    h = jnp.dot(h.astype(mxu_dtype), w2, preferred_element_type=jnp.float32) + params["b2"]
    h = jnp.maximum(h, 0.0)
    return jnp.dot(h.astype(mxu_dtype), w3, preferred_element_type=jnp.float32) + params["b3"]


if __name__ == "__main__":
    key = jax.random.PRNGKey(0)
    k_in, k_par = jax.random.split(key)

    B, input_size, ncat = 8, 2, 4
    z = jax.random.normal(k_in, (B, input_size), jnp.float32)
    params = init_params(k_par, input_size=input_size, ncat=ncat, h_dim=(32, 32))

    # Default path: bf16 MXU inputs (f32 accumulation) -- v6e/v7x MXU-native.
    prep_bf, meta_bf = prepare_params(params, mxu_dtype=jnp.bfloat16)
    out_bf = jax.block_until_ready(decoder_nn_forward(z, prep_bf, meta_bf))
    assert out_bf.shape == (B, ncat)
    assert jnp.allclose(out_bf, reference_forward(z, params, mxu_dtype=jnp.bfloat16),
                        atol=2e-3, rtol=2e-3)
    assert jnp.allclose(out_bf, reference_forward(z, params), atol=1e-1, rtol=1e-1)

    # Exact f32 path (tight check against the f32 reference).
    prep_f32, meta_f32 = prepare_params(params, mxu_dtype=jnp.float32)
    out_f32 = jax.block_until_ready(decoder_nn_forward(z, prep_f32, meta_f32))
    assert out_f32.shape == (B, ncat)
    assert jnp.allclose(out_f32, reference_forward(z, params), atol=1e-4, rtol=1e-4)

    print("KERNEL_OK")
</pallas_src>

<mosaic_0001>
module attributes {stable_mosaic.version = 11 : i64} {
  func.func @_decoder_mlp_kernel(%arg0: i32, %arg1: memref<16x2xf32, #tpu.memory_space<vmem>>, %arg2: memref<2x128xf32, #tpu.memory_space<vmem>>, %arg3: memref<1x128xf32, #tpu.memory_space<vmem>>, %arg4: memref<128x128xbf16, #tpu.memory_space<vmem>>, %arg5: memref<1x128xf32, #tpu.memory_space<vmem>>, %arg6: memref<128x128xbf16, #tpu.memory_space<vmem>>, %arg7: memref<1x128xf32, #tpu.memory_space<vmem>>, %arg8: memref<16x4xf32, #tpu.memory_space<vmem>>) attributes {dimension_semantics = [#tpu.dimension_semantics<parallel>], iteration_bounds = array<i64: 1>, scalar_prefetch = 0 : i64, scratch_operands = 0 : i64, tpu.core_type = #tpu.core_type<tc>, window_params = [{transform_indices = @transform_0, window_bounds = array<i64: 16, 2>}, {pipeline_mode = #tpu.pipeline_mode<synchronous>, transform_indices = @transform_1, window_bounds = array<i64: 2, 128>}, {pipeline_mode = #tpu.pipeline_mode<synchronous>, transform_indices = @transform_2, window_bounds = array<i64: 1, 128>}, {pipeline_mode = #tpu.pipeline_mode<synchronous>, transform_indices = @transform_3, window_bounds = array<i64: 128, 128>}, {pipeline_mode = #tpu.pipeline_mode<synchronous>, transform_indices = @transform_4, window_bounds = array<i64: 1, 128>}, {pipeline_mode = #tpu.pipeline_mode<synchronous>, transform_indices = @transform_5, window_bounds = array<i64: 128, 128>}, {pipeline_mode = #tpu.pipeline_mode<synchronous>, transform_indices = @transform_6, window_bounds = array<i64: 1, 128>}, {transform_indices = @transform_7, window_bounds = array<i64: 16, 4>}]} {
    %c0 = arith.constant 0 : index
    %c0_0 = arith.constant 0 : index
    %0 = vector.load %arg1[%c0, %c0_0] : memref<16x2xf32, #tpu.memory_space<vmem>>, vector<16x2xf32>
    %1 = vector.extract_strided_slice %0 {offsets = [0, 0], sizes = [16, 1], strides = [1, 1]} : vector<16x2xf32> to vector<16x1xf32>
    %c0_1 = arith.constant 0 : index
    %c0_2 = arith.constant 0 : index
    %2 = vector.load %arg2[%c0_1, %c0_2] : memref<2x128xf32, #tpu.memory_space<vmem>>, vector<1x128xf32>
    %3 = vector.broadcast %1 : vector<16x1xf32> to vector<16x128xf32>
    %4 = vector.broadcast %2 : vector<1x128xf32> to vector<16x128xf32>
    %5 = arith.mulf %3, %4 : vector<16x128xf32>
    %6 = vector.extract_strided_slice %0 {offsets = [0, 1], sizes = [16, 1], strides = [1, 1]} : vector<16x2xf32> to vector<16x1xf32>
    %c1 = arith.constant 1 : index
    %c0_3 = arith.constant 0 : index
    %7 = vector.load %arg2[%c1, %c0_3] : memref<2x128xf32, #tpu.memory_space<vmem>>, vector<1x128xf32>
    %8 = vector.broadcast %6 : vector<16x1xf32> to vector<16x128xf32>
    %9 = vector.broadcast %7 : vector<1x128xf32> to vector<16x128xf32>
    %10 = arith.mulf %8, %9 : vector<16x128xf32>
    %11 = arith.addf %5, %10 : vector<16x128xf32>
    %c0_4 = arith.constant 0 : index
    %c0_5 = arith.constant 0 : index
    %12 = vector.load %arg3[%c0_4, %c0_5] : memref<1x128xf32, #tpu.memory_space<vmem>>, vector<1x128xf32>
    %13 = vector.broadcast %12 : vector<1x128xf32> to vector<16x128xf32>
    %14 = arith.addf %11, %13 : vector<16x128xf32>
    %cst = arith.constant 0.000000e+00 : f32
    %15 = vector.broadcast %cst : f32 to vector<16x128xf32>
    %16 = arith.maximumf %14, %15 : vector<16x128xf32>
    %17 = arith.truncf %16 : vector<16x128xf32> to vector<16x128xbf16>
    %c0_6 = arith.constant 0 : index
    %c0_7 = arith.constant 0 : index
    %18 = vector.load %arg4[%c0_6, %c0_7] : memref<128x128xbf16, #tpu.memory_space<vmem>>, vector<128x128xbf16>
    %cst_8 = arith.constant dense<0.000000e+00> : vector<16x128xf32>
    %19 = tpu.matmul %17, %18, %cst_8 {dimension_numbers = #tpu.dot_dimension_numbers<[1], [0], [0], [1], [0, 0, 1, 1], [], []>} : vector<16x128xbf16>, vector<128x128xbf16>, vector<16x128xf32> -> vector<16x128xf32>
    %c0_9 = arith.constant 0 : index
    %c0_10 = arith.constant 0 : index
    %20 = vector.load %arg5[%c0_9, %c0_10] : memref<1x128xf32, #tpu.memory_space<vmem>>, vector<1x128xf32>
    %21 = vector.broadcast %20 : vector<1x128xf32> to vector<16x128xf32>
    %22 = arith.addf %19, %21 : vector<16x128xf32>
    %cst_11 = arith.constant 0.000000e+00 : f32
    %23 = vector.broadcast %cst_11 : f32 to vector<16x128xf32>
    %24 = arith.maximumf %22, %23 : vector<16x128xf32>
    %25 = arith.truncf %24 : vector<16x128xf32> to vector<16x128xbf16>
    %c0_12 = arith.constant 0 : index
    %c0_13 = arith.constant 0 : index
    %26 = vector.load %arg6[%c0_12, %c0_13] : memref<128x128xbf16, #tpu.memory_space<vmem>>, vector<128x128xbf16>
    %cst_14 = arith.constant dense<0.000000e+00> : vector<16x128xf32>
    %27 = tpu.matmul %25, %26, %cst_14 {dimension_numbers = #tpu.dot_dimension_numbers<[1], [0], [0], [1], [0, 0, 1, 1], [], []>} : vector<16x128xbf16>, vector<128x128xbf16>, vector<16x128xf32> -> vector<16x128xf32>
    %c0_15 = arith.constant 0 : index
    %c0_16 = arith.constant 0 : index
    %28 = vector.load %arg7[%c0_15, %c0_16] : memref<1x128xf32, #tpu.memory_space<vmem>>, vector<1x128xf32>
    %29 = vector.broadcast %28 : vector<1x128xf32> to vector<16x128xf32>
    %30 = arith.addf %27, %29 : vector<16x128xf32>
    %31 = vector.extract_strided_slice %30 {offsets = [0, 0], sizes = [16, 4], strides = [1, 1]} : vector<16x128xf32> to vector<16x4xf32>
    %c0_17 = arith.constant 0 : index
    %c0_18 = arith.constant 0 : index
    %32 = vector.load %arg8[%c0_17, %c0_18] : memref<16x4xf32, #tpu.memory_space<vmem>>, vector<16x4xf32>
    tpu.vector_store %arg8[%c0_17, %c0_18], %31 {strides = array<i32>} : memref<16x4xf32, #tpu.memory_space<vmem>>, vector<16x4xf32>,
    return
  }
  func.func @transform_0(%arg0: i32) -> (i32, i32) {
    %c0_i32 = arith.constant 0 : i32
    %c0_i32_0 = arith.constant 0 : i32
    return %arg0, %c0_i32 : i32, i32
  }
  func.func @transform_1(%arg0: i32) -> (i32, i32) {
    %c0_i32 = arith.constant 0 : i32
    %c0_i32_0 = arith.constant 0 : i32
    %c0_i32_1 = arith.constant 0 : i32
    return %c0_i32, %c0_i32_0 : i32, i32
  }
  func.func @transform_2(%arg0: i32) -> (i32, i32) {
    %c0_i32 = arith.constant 0 : i32
    %c0_i32_0 = arith.constant 0 : i32
    %c0_i32_1 = arith.constant 0 : i32
    return %c0_i32, %c0_i32_0 : i32, i32
  }
  func.func @transform_3(%arg0: i32) -> (i32, i32) {
    %c0_i32 = arith.constant 0 : i32
    %c0_i32_0 = arith.constant 0 : i32
    %c0_i32_1 = arith.constant 0 : i32
    return %c0_i32, %c0_i32_0 : i32, i32
  }
  func.func @transform_4(%arg0: i32) -> (i32, i32) {
    %c0_i32 = arith.constant 0 : i32
    %c0_i32_0 = arith.constant 0 : i32
    %c0_i32_1 = arith.constant 0 : i32
    return %c0_i32, %c0_i32_0 : i32, i32
  }
  func.func @transform_5(%arg0: i32) -> (i32, i32) {
    %c0_i32 = arith.constant 0 : i32
    %c0_i32_0 = arith.constant 0 : i32
    %c0_i32_1 = arith.constant 0 : i32
    return %c0_i32, %c0_i32_0 : i32, i32
  }
  func.func @transform_6(%arg0: i32) -> (i32, i32) {
    %c0_i32 = arith.constant 0 : i32
    %c0_i32_0 = arith.constant 0 : i32
    %c0_i32_1 = arith.constant 0 : i32
    return %c0_i32, %c0_i32_0 : i32, i32
  }
  func.func @transform_7(%arg0: i32) -> (i32, i32) {
    %c0_i32 = arith.constant 0 : i32
    %c0_i32_0 = arith.constant 0 : i32
    return %arg0, %c0_i32 : i32, i32
  }
}

</mosaic_0001>

<llo_original>
// kernel: tpu_custom_call.1
$region0: #{tpu_custom_call.1}
  #allocation0 [shape = 'u32[]', space=smem, size = 0x4, offset = 0x4, fixed_abs, tag = 'smem constant byte address 0x4 - core index']
  #allocation1 [shape = 'u32[144,128]{1,0:T(1,128)}', space=vmem, size = 0x12000, scoped, tag = 'internal scratch']
  %s0 = inlined_call_operand.vmem [shape: f32[16,2], index: 0, kind: input, shape index: {}]
  %s1 = inlined_call_operand.vmem [shape: f32[2,128], index: 1, kind: input, shape index: {}]
  %s2 = inlined_call_operand.vmem [shape: f32[1,128], index: 2, kind: input, shape index: {}]
  %s3 = inlined_call_operand.hbm [shape: bf16[128,128], index: 3, kind: input, shape index: {}]
  %s4 = inlined_call_operand.vmem [shape: f32[1,128], index: 4, kind: input, shape index: {}]
  %s5 = inlined_call_operand.hbm [shape: bf16[128,128], index: 5, kind: input, shape index: {}]
  %s6 = inlined_call_operand.vmem [shape: f32[1,128], index: 6, kind: input, shape index: {}]
  %s7 = inlined_call_operand.vmem [shape: f32[16,4], index: 7, kind: output, shape index: {}]
  %s8 = sld [smem:[#allocation0]]
  $region46: #{tpu_custom_call.1} parent=0
    _
  %s10 = ssub.s32 1, %s8
  %s11 = scalar_select 0, %s10, %s8
  $region1: #{tpu_custom_call.1} parent=0
    #allocation2 [shape = 'u8[32768]{0}', space=vmem, size = 0x8000, scoped, tag = 'input window, operand 3, single buffered']
    #allocation3 [shape = 's32[1]{0}', space=sflag, size = 0x4, scoped, tag = 'scoped memory for tpu_custom_call.1']
    #allocation4 [shape = 'u8[32768]{0}', space=vmem, size = 0x8000, scoped, tag = 'input window, operand 5, single buffered']
    #allocation5 [shape = 's32[1]{0}', space=sflag, size = 0x4, scoped, tag = 'scoped memory for tpu_custom_call.1']
    %12 = vsyncpa [#allocation3], 0
    %13 = vsyncpa [#allocation5], 0
    // Predicated region
    $region2: #{tpu_custom_call.1} parent=1 // pred_check
      _
    $region3: #{tpu_custom_call.1} parent=1 // pred_check_branch
      %15 = sbr.rel (0) target = $region5
    $region4: #{tpu_custom_call.1} parent=1 // pred_region
      _
    $region5: #{tpu_custom_call.1} parent=1 // pred_fallthru
      _
    // Predicated region
    $region6: #{tpu_custom_call.1} parent=1 // pred_check
      _
    $region7: #{tpu_custom_call.1} parent=1 // pred_check_branch
      %17 = sbr.rel (0) target = $region9
    $region8: #{tpu_custom_call.1} parent=1 // pred_region
      _
    $region9: #{tpu_custom_call.1} parent=1 // pred_fallthru
      _
    // Predicated region
    $region10: #{tpu_custom_call.1} parent=1 // pred_check
      _
    $region11: #{tpu_custom_call.1} parent=1 // pred_check_branch
      %19 = sbr.rel (0) target = $region13
    $region12: #{tpu_custom_call.1} parent=1 // pred_region
      _
    $region13: #{tpu_custom_call.1} parent=1 // pred_fallthru
      _
    // Predicated region
    $region14: #{tpu_custom_call.1} parent=1 // pred_check
      _
    $region15: #{tpu_custom_call.1} parent=1 // pred_check_branch
      %21 = sbr.rel (0) target = $region17
    $region16: #{tpu_custom_call.1} parent=1 // pred_region
      %s23 = ssub.s32 1024, 1024
      %24 = vsyncadd [#allocation3], %s23
      %s25 = sshll.u32 [#allocation2], 4
      %s26 = int_to_ptr.vmem [resolvable:$true] %s25
      %31 = dma.hbm_to_vmem [thread:$0]  %s3, 1024, %s26, [#allocation3], 64, 64, 4
    $region17: #{tpu_custom_call.1} parent=1 // pred_fallthru
      _
    // Predicated region
    $region18: #{tpu_custom_call.1} parent=1 // pred_check
      _
    $region19: #{tpu_custom_call.1} parent=1 // pred_check_branch
      %33 = sbr.rel (0) target = $region21
    $region20: #{tpu_custom_call.1} parent=1 // pred_region
      _
    $region21: #{tpu_custom_call.1} parent=1 // pred_fallthru
      _
    // Predicated region
    $region22: #{tpu_custom_call.1} parent=1 // pred_check
      _
    $region23: #{tpu_custom_call.1} parent=1 // pred_check_branch
      %35 = sbr.rel (0) target = $region25
    $region24: #{tpu_custom_call.1} parent=1 // pred_region
      %s37 = ssub.s32 1024, 1024
      %38 = vsyncadd [#allocation5], %s37
      %s39 = sshll.u32 [#allocation4], 4
      %s40 = int_to_ptr.vmem [resolvable:$true] %s39
      %45 = dma.hbm_to_vmem [thread:$0]  %s5, 1024, %s40, [#allocation5], 64, 64, 4
    $region25: #{tpu_custom_call.1} parent=1 // pred_fallthru
      _
    // Predicated region
    $region26: #{tpu_custom_call.1} parent=1 // pred_check
      _
    $region27: #{tpu_custom_call.1} parent=1 // pred_check_branch
      %47 = sbr.rel (0) target = $region29
    $region28: #{tpu_custom_call.1} parent=1 // pred_region
      _
    $region29: #{tpu_custom_call.1} parent=1 // pred_fallthru
      _
    // Predicated region
    $region30: #{tpu_custom_call.1} parent=1 // pred_check
      _
    $region31: #{tpu_custom_call.1} parent=1 // pred_check_branch
      %49 = sbr.rel (0) target = $region33
    $region32: #{tpu_custom_call.1} parent=1 // pred_region
      %50 = dma.done [#allocation3], 1024
    $region33: #{tpu_custom_call.1} parent=1 // pred_fallthru
      _
    // Predicated region
    $region34: #{tpu_custom_call.1} parent=1 // pred_check
      _
    $region35: #{tpu_custom_call.1} parent=1 // pred_check_branch
      %52 = sbr.rel (0) target = $region37
    $region36: #{tpu_custom_call.1} parent=1 // pred_region
      %53 = dma.done [#allocation5], 1024
    $region37: #{tpu_custom_call.1} parent=1 // pred_fallthru
      _
    %v55 = vld [vmem:[%s0] sm:$0xff]
    %v56 = vld [vmem:[%s0 + $0x8] sm:$0xff]
    %v57 = vld [vmem:[%s1] sm:$0x1]
    %59 = vset.pattern.permute.xlu0 0
    %60 = vperm.xlu0 %59, %v55
    %v61 = vpop.permute.xlu0 %60
    %64 = vset.pattern.permute.xlu0 0
    %65 = vperm.xlu0 %64, %v56
    %v66 = vpop.permute.xlu0 %65
    %v68 = vlaneseq
    %v69 = vshrl.u32 %v68, 7
    %v70 = vsub.s32 0, %v69
    %v71 = vrot.slane %v57, %v70
    %v72 = vmul.f32 %v61, %v71
    %v73 = vmul.f32 %v66, %v71
    %v74 = vld [vmem:[%s1 + $0x1] sm:$0x1]
    %75 = vset.pattern.permute.xlu0 1
    %76 = vperm.xlu0 %75, %v55
    %v77 = vpop.permute.xlu0 %76
    %79 = vset.pattern.permute.xlu0 1
    %80 = vperm.xlu0 %79, %v56
    %v81 = vpop.permute.xlu0 %80
    %v83 = vlaneseq
    %v84 = vshrl.u32 %v83, 7
    %v85 = vsub.s32 0, %v84
    %v86 = vrot.slane %v74, %v85
    %v87 = vmul.f32 %v77, %v86
    %v88 = vmul.f32 %v81, %v86
    %v89 = vadd.f32 %v72, %v87
    %v90 = vadd.f32 %v73, %v88
    %v91 = vld [vmem:[%s2] sm:$0x1]
    %v93 = vlaneseq
    %v94 = vshrl.u32 %v93, 7
    %v95 = vsub.s32 0, %v94
    %v96 = vrot.slane %v91, %v95
    %v98 = vadd.f32 %v89, %v96
    %v99 = vadd.f32 %v90, %v96
    %v100 = vmax.f32 %v98, 0.0
    %v101 = vmax.f32 %v99, 0.0
    %v102 = vpack.c.bf16 %v101, %v100
    %v103 = vld [vmem:[#allocation2] sm:$0xf]
    %v104 = vld [vmem:[#allocation2 + $0x4] sm:$0xf]
    %v105 = vld [vmem:[#allocation2 + $0x8] sm:$0xf]
    %v106 = vld [vmem:[#allocation2 + $0xc] sm:$0xf]
    %v107 = vld [vmem:[#allocation2 + $0x10] sm:$0xf]
    %v108 = vld [vmem:[#allocation2 + $0x14] sm:$0xf]
    %v109 = vld [vmem:[#allocation2 + $0x18] sm:$0xf]
    %v110 = vld [vmem:[#allocation2 + $0x1c] sm:$0xf]
    %v111 = vld [vmem:[#allocation2 + $0x20] sm:$0xf]
    %v112 = vld [vmem:[#allocation2 + $0x24] sm:$0xf]
    %v113 = vld [vmem:[#allocation2 + $0x28] sm:$0xf]
    %v114 = vld [vmem:[#allocation2 + $0x2c] sm:$0xf]
    %v115 = vld [vmem:[#allocation2 + $0x30] sm:$0xf]
    %v116 = vld [vmem:[#allocation2 + $0x34] sm:$0xf]
    %v117 = vld [vmem:[#allocation2 + $0x38] sm:$0xf]
    %v118 = vld [vmem:[#allocation2 + $0x3c] sm:$0xf]
    %v119 = vld [vmem:[%s4] sm:$0x1]
    %v121 = vlaneseq
    %v122 = vshrl.u32 %v121, 7
    %v123 = vsub.s32 0, %v122
    %v124 = vrot.slane %v119, %v123
    %v142 = vunpack.c.l.b16 %v103
    %v143 = vunpack.c.l.b16 %v104
    %v144 = vunpack.c.l.b16 %v105
    %v145 = vunpack.c.l.b16 %v106
    %v146 = vunpack.c.l.b16 %v107
    %v147 = vunpack.c.l.b16 %v108
    %v148 = vunpack.c.l.b16 %v109
    %v149 = vunpack.c.l.b16 %v110
    %v150 = vunpack.c.l.b16 %v111
    %v151 = vunpack.c.l.b16 %v112
    %v152 = vunpack.c.l.b16 %v113
    %v153 = vunpack.c.l.b16 %v114
    %v154 = vunpack.c.l.b16 %v115
    %v155 = vunpack.c.l.b16 %v116
    %v156 = vunpack.c.l.b16 %v117
    %v157 = vunpack.c.l.b16 %v118
    %v158 = vpack.c.b16 %v143, %v142
    %v159 = vpack.c.b16 %v145, %v144
    %v160 = vpack.c.b16 %v147, %v146
    %v161 = vpack.c.b16 %v149, %v148
    %v162 = vpack.c.b16 %v151, %v150
    %v163 = vpack.c.b16 %v153, %v152
    %v164 = vpack.c.b16 %v155, %v154
    %v165 = vpack.c.b16 %v157, %v156
    %174 = vmatprep.subr.bf16.mxu0 0
    %175 = vmatpush1.bf16.msra.mxu0 %v158
    %176 = vmatprep.subr.bf16.mxu0 0
    %177 = vmatpush1.bf16.msra.mxu0 %v159
    %178 = vmatprep.subr.bf16.mxu0 0
    %179 = vmatpush1.bf16.msra.mxu0 %v160
    %180 = vmatprep.subr.bf16.mxu0 0
    %181 = vmatpush1.bf16.msra.mxu0 %v161
    %182 = vmatprep.subr.bf16.mxu0 0
    %183 = vmatpush1.bf16.msra.mxu0 %v162
    %184 = vmatprep.subr.bf16.mxu0 0
    %185 = vmatpush1.bf16.msra.mxu0 %v163
    %186 = vmatprep.subr.bf16.mxu0 0
    %187 = vmatpush1.bf16.msra.mxu0 %v164
    %188 = vmatprep.subr.bf16.mxu0 0
    %189 = vmatpush1.bf16.msra.mxu0 %v165
    %190 = vmatprep.subr.bf16.mxu0 0
    %191 = vmatpush1.bf16.msra.mxu0 0
    %192 = vmatprep.subr.bf16.mxu0 0
    %193 = vmatpush1.bf16.msra.mxu0 0
    %194 = vmatprep.subr.bf16.mxu0 0
    %195 = vmatpush1.bf16.msra.mxu0 0
    %196 = vmatprep.subr.bf16.mxu0 0
    %197 = vmatpush1.bf16.msra.mxu0 0
    %198 = vmatprep.subr.bf16.mxu0 0
    %199 = vmatpush1.bf16.msra.mxu0 0
    %200 = vmatprep.subr.bf16.mxu0 0
    %201 = vmatpush1.bf16.msra.mxu0 0
    %202 = vmatprep.subr.bf16.mxu0 0
    %203 = vmatpush1.bf16.msra.mxu0 0
    %204 = vmatprep.subr.bf16.mxu0 0
    %205 = vmatpush1.bf16.msra.mxu0 0
    %206 = vmatprep.mubr.bf16.mxu0 0
    %207 = vmatmul.mubr.bf16.gmra.mrb[0].mxu0 %v102
    %v208 = vpop.f32.mrb[0].mxu0
    %v209 = vadd.f32 %v124, %v208
    %v210 = vpop.f32.mrb[0].mxu0
    %v211 = vpop.f32.mrb[0].mxu0
    %v212 = vadd.f32 %v124, %v211
    %v213 = vpop.f32.mrb[0].mxu0
    %214 = vdwg.mxu0
    %v215 = vmax.f32 %v209, 0.0
    %v216 = vmax.f32 %v212, 0.0
    %v217 = vpack.c.bf16 %v216, %v215
    %v218 = vld [vmem:[#allocation4] sm:$0xf]
    %v219 = vld [vmem:[#allocation4 + $0x4] sm:$0xf]
    %v220 = vld [vmem:[#allocation4 + $0x8] sm:$0xf]
    %v221 = vld [vmem:[#allocation4 + $0xc] sm:$0xf]
    %v222 = vld [vmem:[#allocation4 + $0x10] sm:$0xf]
    %v223 = vld [vmem:[#allocation4 + $0x14] sm:$0xf]
    %v224 = vld [vmem:[#allocation4 + $0x18] sm:$0xf]
    %v225 = vld [vmem:[#allocation4 + $0x1c] sm:$0xf]
    %v226 = vld [vmem:[#allocation4 + $0x20] sm:$0xf]
    %v227 = vld [vmem:[#allocation4 + $0x24] sm:$0xf]
    %v228 = vld [vmem:[#allocation4 + $0x28] sm:$0xf]
    %v229 = vld [vmem:[#allocation4 + $0x2c] sm:$0xf]
    %v230 = vld [vmem:[#allocation4 + $0x30] sm:$0xf]
    %v231 = vld [vmem:[#allocation4 + $0x34] sm:$0xf]
    %v232 = vld [vmem:[#allocation4 + $0x38] sm:$0xf]
    %v233 = vld [vmem:[#allocation4 + $0x3c] sm:$0xf]
    %v234 = vld [vmem:[%s6] sm:$0x1]
    %v236 = vlaneseq
    %v237 = vshrl.u32 %v236, 7
    %v238 = vsub.s32 0, %v237
    %v239 = vrot.slane %v234, %v238
    %v257 = vunpack.c.l.b16 %v218
    %v258 = vunpack.c.l.b16 %v219
    %v259 = vunpack.c.l.b16 %v220
    %v260 = vunpack.c.l.b16 %v221
    %v261 = vunpack.c.l.b16 %v222
    %v262 = vunpack.c.l.b16 %v223
    %v263 = vunpack.c.l.b16 %v224
    %v264 = vunpack.c.l.b16 %v225
    %v265 = vunpack.c.l.b16 %v226
    %v266 = vunpack.c.l.b16 %v227
    %v267 = vunpack.c.l.b16 %v228
    %v268 = vunpack.c.l.b16 %v229
    %v269 = vunpack.c.l.b16 %v230
    %v270 = vunpack.c.l.b16 %v231
    %v271 = vunpack.c.l.b16 %v232
    %v272 = vunpack.c.l.b16 %v233
    %v273 = vpack.c.b16 %v258, %v257
    %v274 = vpack.c.b16 %v260, %v259
    %v275 = vpack.c.b16 %v262, %v261
    %v276 = vpack.c.b16 %v264, %v263
    %v277 = vpack.c.b16 %v266, %v265
    %v278 = vpack.c.b16 %v268, %v267
    %v279 = vpack.c.b16 %v270, %v269
    %v280 = vpack.c.b16 %v272, %v271
    %289 = vmatprep.subr.bf16.mxu0 0
    %290 = vmatpush1.bf16.msra.mxu0 %v273
    %291 = vmatprep.subr.bf16.mxu0 0
    %292 = vmatpush1.bf16.msra.mxu0 %v274
    %293 = vmatprep.subr.bf16.mxu0 0
    %294 = vmatpush1.bf16.msra.mxu0 %v275
    %295 = vmatprep.subr.bf16.mxu0 0
    %296 = vmatpush1.bf16.msra.mxu0 %v276
    %297 = vmatprep.subr.bf16.mxu0 0
    %298 = vmatpush1.bf16.msra.mxu0 %v277
    %299 = vmatprep.subr.bf16.mxu0 0
    %300 = vmatpush1.bf16.msra.mxu0 %v278
    %301 = vmatprep.subr.bf16.mxu0 0
    %302 = vmatpush1.bf16.msra.mxu0 %v279
    %303 = vmatprep.subr.bf16.mxu0 0
    %304 = vmatpush1.bf16.msra.mxu0 %v280
    %305 = vmatprep.subr.bf16.mxu0 0
    %306 = vmatpush1.bf16.msra.mxu0 0
    %307 = vmatprep.subr.bf16.mxu0 0
    %308 = vmatpush1.bf16.msra.mxu0 0
    %309 = vmatprep.subr.bf16.mxu0 0
    %310 = vmatpush1.bf16.msra.mxu0 0
    %311 = vmatprep.subr.bf16.mxu0 0
    %312 = vmatpush1.bf16.msra.mxu0 0
    %313 = vmatprep.subr.bf16.mxu0 0
    %314 = vmatpush1.bf16.msra.mxu0 0
    %315 = vmatprep.subr.bf16.mxu0 0
    %316 = vmatpush1.bf16.msra.mxu0 0
    %317 = vmatprep.subr.bf16.mxu0 0
    %318 = vmatpush1.bf16.msra.mxu0 0
    %319 = vmatprep.subr.bf16.mxu0 0
    %320 = vmatpush1.bf16.msra.mxu0 0
    %321 = vmatprep.mubr.bf16.mxu0 0
    %322 = vmatmul.mubr.bf16.gmra.mrb[0].mxu0 %v217
    %v323 = vpop.f32.mrb[0].mxu0
    %v324 = vadd.f32 %v239, %v323
    %v325 = vpop.f32.mrb[0].mxu0
    %v326 = vpop.f32.mrb[0].mxu0
    %v327 = vadd.f32 %v239, %v326
    %v328 = vpop.f32.mrb[0].mxu0
    %329 = vdwg.mxu0
    %vm330 = vcmask 31744
    %331 = vst.msk [vmem:[%s7] sm:$0xff] %vm330, %v324
    %332 = vst.msk [vmem:[%s7 + $0x8] sm:$0xff] %vm330, %v327
    // Predicated region
    $region38: #{tpu_custom_call.1} parent=1 // pred_check
      _
    $region39: #{tpu_custom_call.1} parent=1 // pred_check_branch
      %334 = sbr.rel (0) target = $region41
    $region40: #{tpu_custom_call.1} parent=1 // pred_region
      _
    $region41: #{tpu_custom_call.1} parent=1 // pred_fallthru
      _
    // Predicated region
    $region42: #{tpu_custom_call.1} parent=1 // pred_check
      _
    $region43: #{tpu_custom_call.1} parent=1 // pred_check_branch
      %336 = sbr.rel (0) target = $region45
    $region44: #{tpu_custom_call.1} parent=1 // pred_region
      _
    $region45: #{tpu_custom_call.1} parent=1 // pred_fallthru
      _
    %337 = vsyncpa [#allocation3], 1
    %338 = vsyncpa [#allocation5], 1

</llo_original>
